<compile_context>
chip_gen: v5e
topology: v5e:2x2
jax: 0.10.0
libtpu: 0.0.40
codegen_flags: <defaults>
</compile_context>

<pallas_src>
import re
from functools import partial

import jax
import jax.numpy as jnp
from jax.experimental import pallas as pl
from jax.experimental.pallas import tpu as pltpu

EMBED = 32    # embedding_dim
HIDDEN = 64   # LSTM hidden_dim


def _round_up(x, m):
    return ((x + m - 1) // m) * m


def _tpu_generation():
    """Best-effort TPU generation from device_kind; 0 if unknown."""
    try:
        kind = jax.devices()[0].device_kind.lower()
        m = re.search(r"(\d+)", kind)
        return int(m.group(1)) if m else 0
    except Exception:
        return 0


# ----------------------------------------------------------------------------- kernel
def critic_kernel(idx_ref,                     # (3, TB) int32: [x_idx, y_idx+S, a_idx+2S]
                  t_all_ref,                   # (3H, OH_W) bf16: folded emb->[i|g|o] tables
                  b_all_ref,                   # (3H, 1) f32: b_ih + b_hh for [i|g|o]
                  fc1_w_ref, fc1_b_ref,        # (64, H) bf16, (64, 1) f32
                  fc2_w_ref, fc2_b_ref,        # (64, 1) f32, (1, 1) f32
                  out_ref,                     # (1, TB) f32
                  *, act_dtype):
    tb = idx_ref.shape[1]
    oh_w = t_all_ref.shape[1]
    H = HIDDEN

    # One-hot over the concatenated [x | y | a] vocabulary (disjoint ranges),
    # batch on the lane axis.  Replaces gather + concat + input matmul.
    iota = jax.lax.broadcasted_iota(jnp.int32, (oh_w, tb), 0)
    r0 = idx_ref[0:1, :]
    r1 = idx_ref[1:2, :]
    r2 = idx_ref[2:3, :]
    oh = ((iota == r0) | (iota == r1) | (iota == r2)).astype(jnp.bfloat16)   # (OH_W, TB)

    # All three gates in ONE matmul; f-gate omitted (c0 == 0), h0 == 0.
    gates = jnp.dot(t_all_ref[...], oh,
                    preferred_element_type=jnp.float32) + b_all_ref[...]     # (3H, TB) f32
    gates = gates.astype(act_dtype)

    # sigmoid(x) = 0.5 * tanh(0.5 x) + 0.5  -> a single EUP transcendental.
    def _sig(x):
        return 0.5 * jnp.tanh(0.5 * x) + 0.5

    g_i = _sig(gates[0:H, :])                 # input gate
    g_g = jnp.tanh(gates[H:2 * H, :])         # cell gate
    g_o = _sig(gates[2 * H:3 * H, :])         # output gate

    c = g_i * g_g                             # i * g  (+ f * c0 == 0)
    h = g_o * jnp.tanh(c)                     # (H, TB) = lstm_out^T

    # fc1 + ReLU  (x1^T = W1 @ h^T + b1)
    x1 = jnp.dot(fc1_w_ref[...], h.astype(jnp.bfloat16),
                 preferred_element_type=jnp.float32) + fc1_b_ref[...]
    x1 = jnp.maximum(x1, 0.0)                 # (64, TB) f32

    # fc2 as VPU multiply + sublane reduction (avoid an N=1 MXU matmul);
    # result is a lane-dense (1, TB) row.
    q = jnp.sum(x1 * fc2_w_ref[...], axis=0, keepdims=True) + fc2_b_ref[...]
    out_ref[...] = q


# ----------------------------------------------------------------------------- params
def init_params(key, state_dim, action_dim, embedding_dim=EMBED, hidden_dim=HIDDEN):
    """PyTorch-layout parameters (what the nn.Module would hold)."""
    ks = jax.random.split(key, 11)
    h4 = 4 * hidden_dim
    inp = 3 * embedding_dim
    s_lstm = hidden_dim ** -0.5
    s_fc1 = hidden_dim ** -0.5
    s_fc2 = 64 ** -0.5
    u = lambda k, shape, s: jax.random.uniform(k, shape, jnp.float32, -s, s)
    return {
        # nn.Embedding default init ~ N(0, 1)
        "x_emb": jax.random.normal(ks[0], (state_dim, embedding_dim), jnp.float32),
        "y_emb": jax.random.normal(ks[1], (state_dim, embedding_dim), jnp.float32),
        "a_emb": jax.random.normal(ks[2], (action_dim, embedding_dim), jnp.float32),
        # nn.LSTM (gate order i|f|g|o), U(-1/sqrt(H), 1/sqrt(H))
        "w_ih": u(ks[3], (h4, inp), s_lstm),
        "w_hh": u(ks[4], (h4, hidden_dim), s_lstm),   # unused at runtime (h0 = 0)
        "b_ih": u(ks[5], (h4,), s_lstm),
        "b_hh": u(ks[6], (h4,), s_lstm),
        # fc1: Linear(hidden_dim, 64), fc2: Linear(64, 1)
        "fc1_w": u(ks[7], (64, hidden_dim), s_fc1),
        "fc1_b": u(ks[8], (64,), s_fc1),
        "fc2_w": u(ks[9], (1, 64), s_fc2),
        "fc2_b": u(ks[10], (1,), s_fc2),
    }


def prepare_kernel_params(params, state_dim, action_dim):
    """Fold embeddings through the i/g/o gate weights into ONE concatenated
    feature-major table, cast matmul operands to bf16.  Exact math (h0 = c0 = 0)."""
    H = HIDDEN
    E = EMBED
    S, A = state_dim, action_dim
    # Pad the one-hot vocabulary only to 16 (bf16 sublane pack) - never to 128.
    oh_w = _round_up(2 * S + A, 16)
    b_sum = params["b_ih"] + params["b_hh"]

    def fold(row_slice):
        w = params["w_ih"][row_slice]                      # (H, 3E)
        t = jnp.concatenate(
            [w[:, 0:E] @ params["x_emb"].T,                # (H, S)
             w[:, E:2 * E] @ params["y_emb"].T,            # (H, S)
             w[:, 2 * E:3 * E] @ params["a_emb"].T],       # (H, A)
            axis=1)
        return jnp.pad(t, ((0, 0), (0, oh_w - t.shape[1])))   # (H, OH_W)

    # Single fused table / bias in gate order [i | g | o]  (f-gate dropped).
    t_all = jnp.concatenate(
        [fold(slice(0, H)), fold(slice(2 * H, 3 * H)), fold(slice(3 * H, 4 * H))],
        axis=0).astype(jnp.bfloat16)                       # (3H, OH_W)
    b_all = jnp.concatenate(
        [b_sum[0:H], b_sum[2 * H:3 * H], b_sum[3 * H:4 * H]],
        axis=0).reshape(3 * H, 1).astype(jnp.float32)      # (3H, 1)

    return {
        "t_all": t_all,
        "b_all": b_all,
        "fc1_w": params["fc1_w"].astype(jnp.bfloat16),             # (64, H)
        "fc1_b": params["fc1_b"].reshape(64, 1).astype(jnp.float32),
        "fc2_w_col": params["fc2_w"].reshape(64, 1).astype(jnp.float32),
        "fc2_b": params["fc2_b"].reshape(1, 1).astype(jnp.float32),
        "y_offset": S,
        "a_offset": 2 * S,
    }


# ----------------------------------------------------------------------------- wrapper
def _choose_tile(B, num_tc):
    """Lane tile: one big tile on single-TC chips; >=2 blocks on v7x when possible."""
    bp_min = _round_up(max(B, 1), 128)
    if num_tc > 1:
        tb = max(128, _round_up(pl.cdiv(bp_min, num_tc), 128))
        tb = min(tb, 2048)
    else:
        tb = min(2048, bp_min)
    return tb


def deterministic_critic(state, action, kparams, *, act_dtype=None, num_tc=None):
    gen = _tpu_generation()
    if act_dtype is None:
        # bf16 EUP/VPU exists on v6e/v7x; v5e (and unknown) stay f32.
        act_dtype = jnp.bfloat16 if gen >= 6 else jnp.float32
    if num_tc is None:
        num_tc = 2 if gen >= 7 else 1

    B = state.shape[0]
    TB = _choose_tile(B, num_tc)
    Bp = _round_up(max(B, 1), TB)
    G = Bp // TB

    # Indices offset into the concatenated [x | y | a] vocabulary, batch on lanes.
    idx = jnp.stack([state[:, 0],
                     state[:, 1] + kparams["y_offset"],
                     action + kparams["a_offset"]], axis=0).astype(jnp.int32)  # (3, B)
    idx = jnp.pad(idx, ((0, 0), (0, Bp - B)))      # padded rows select index 0 (discarded)

    H3, OH_W = kparams["t_all"].shape
    H = H3 // 3

    flops = Bp * (2 * OH_W * H3 + 2 * H * 64 + 2 * 64)
    transcendentals = Bp * 4 * H                   # 3 gate tanh + tanh(c)
    bytes_accessed = (idx.size * 4 + Bp * 4
                      + 2 * (H3 * OH_W + 64 * H)               # bf16 weights
                      + 4 * (H3 + 64 + 64 + 1))                # f32 biases / fc2

    const2 = lambda i: (0, 0)
    wspec = lambda arr: pl.BlockSpec(arr.shape, const2)        # resident weights

    out = pl.pallas_call(
        partial(critic_kernel, act_dtype=act_dtype),
        out_shape=jax.ShapeDtypeStruct((1, Bp), jnp.float32),
        grid=(G,),
        in_specs=[
            pl.BlockSpec((3, TB), lambda i: (0, i)),           # indices, tiled over batch
            wspec(kparams["t_all"]), wspec(kparams["b_all"]),
            wspec(kparams["fc1_w"]), wspec(kparams["fc1_b"]),
            wspec(kparams["fc2_w_col"]), wspec(kparams["fc2_b"]),
        ],
        out_specs=pl.BlockSpec((1, TB), lambda i: (0, i)),     # lane-dense q row
        compiler_params=pltpu.CompilerParams(dimension_semantics=("parallel",)),
        cost_estimate=pl.CostEstimate(flops=flops,
                                      transcendentals=transcendentals,
                                      bytes_accessed=bytes_accessed),
    )(idx,
      kparams["t_all"], kparams["b_all"],
      kparams["fc1_w"], kparams["fc1_b"],
      kparams["fc2_w_col"], kparams["fc2_b"])

    return out[0, :B].reshape(B, 1)


# ----------------------------------------------------------------------------- reference
def reference_critic(state, action, params):
    """Pure-JAX f32 mirror of the PyTorch forward (for correctness check)."""
    H = HIDDEN
    x = params["x_emb"][state[:, 0]]
    y = params["y_emb"][state[:, 1]]
    a = params["a_emb"][action]
    combined = jnp.concatenate([x, y, a], axis=-1)                           # (B, 3E)
    gates = combined @ params["w_ih"].T + params["b_ih"] + params["b_hh"]    # h0 = 0
    i = jax.nn.sigmoid(gates[:, 0:H])
    g = jnp.tanh(gates[:, 2 * H:3 * H])
    o = jax.nn.sigmoid(gates[:, 3 * H:4 * H])
    c = i * g                                                                # c0 = 0
    h = o * jnp.tanh(c)
    x1 = jnp.maximum(h @ params["fc1_w"].T + params["fc1_b"], 0.0)
    return x1 @ params["fc2_w"].T + params["fc2_b"]                          # (B, 1)


if __name__ == "__main__":
    STATE_DIM = 10
    ACTION_DIM = 4
    BATCH = 2

    key = jax.random.PRNGKey(0)
    k_params, k_state, k_action = jax.random.split(key, 3)

    params = init_params(k_params, STATE_DIM, ACTION_DIM)
    kparams = prepare_kernel_params(params, STATE_DIM, ACTION_DIM)

    state = jax.random.randint(k_state, (BATCH, 2), 0, STATE_DIM, dtype=jnp.int32)
    action = jax.random.randint(k_action, (BATCH,), 0, ACTION_DIM, dtype=jnp.int32)

    q_value = deterministic_critic(state, action, kparams)
    jax.block_until_ready(q_value)

    assert q_value.shape == (BATCH, 1) and q_value.dtype == jnp.float32

    q_ref = reference_critic(state, action, params)
    assert float(jnp.max(jnp.abs(q_value - q_ref))) < 5e-2, "kernel mismatch vs reference"

    print("KERNEL_OK")
</pallas_src>

<mosaic_0001>
module attributes {stable_mosaic.version = 11 : i64} {
  func.func @critic_kernel(%arg0: i32, %arg1: memref<3x128xi32, #tpu.memory_space<vmem>>, %arg2: memref<192x32xbf16, #tpu.memory_space<vmem>>, %arg3: memref<192x1xf32, #tpu.memory_space<vmem>>, %arg4: memref<64x64xbf16, #tpu.memory_space<vmem>>, %arg5: memref<64x1xf32, #tpu.memory_space<vmem>>, %arg6: memref<64x1xf32, #tpu.memory_space<vmem>>, %arg7: memref<1x1xf32, #tpu.memory_space<vmem>>, %arg8: memref<1x128xf32, #tpu.memory_space<vmem>>) attributes {dimension_semantics = [#tpu.dimension_semantics<parallel>], iteration_bounds = array<i64: 1>, scalar_prefetch = 0 : i64, scratch_operands = 0 : i64, tpu.core_type = #tpu.core_type<tc>, window_params = [{transform_indices = @transform_0, window_bounds = array<i64: 3, 128>}, {pipeline_mode = #tpu.pipeline_mode<synchronous>, transform_indices = @transform_1, window_bounds = array<i64: 192, 32>}, {pipeline_mode = #tpu.pipeline_mode<synchronous>, transform_indices = @transform_2, window_bounds = array<i64: 192, 1>}, {pipeline_mode = #tpu.pipeline_mode<synchronous>, transform_indices = @transform_3, window_bounds = array<i64: 64, 64>}, {pipeline_mode = #tpu.pipeline_mode<synchronous>, transform_indices = @transform_4, window_bounds = array<i64: 64, 1>}, {pipeline_mode = #tpu.pipeline_mode<synchronous>, transform_indices = @transform_5, window_bounds = array<i64: 64, 1>}, {pipeline_mode = #tpu.pipeline_mode<synchronous>, transform_indices = @transform_6, window_bounds = array<i64: 1, 1>}, {transform_indices = @transform_7, window_bounds = array<i64: 1, 128>}]} {
    %0 = tpu.iota {dimensions = array<i32: 0>} : vector<32x128xi32>
    %c0 = arith.constant 0 : index
    %c0_0 = arith.constant 0 : index
    %1 = vector.load %arg1[%c0, %c0_0] : memref<3x128xi32, #tpu.memory_space<vmem>>, vector<1x128xi32>
    %c1 = arith.constant 1 : index
    %c0_1 = arith.constant 0 : index
    %2 = vector.load %arg1[%c1, %c0_1] : memref<3x128xi32, #tpu.memory_space<vmem>>, vector<1x128xi32>
    %c2 = arith.constant 2 : index
    %c0_2 = arith.constant 0 : index
    %3 = vector.load %arg1[%c2, %c0_2] : memref<3x128xi32, #tpu.memory_space<vmem>>, vector<1x128xi32>
    %4 = vector.broadcast %1 : vector<1x128xi32> to vector<32x128xi32>
    %5 = arith.cmpi eq, %0, %4 : vector<32x128xi32>
    %6 = vector.broadcast %2 : vector<1x128xi32> to vector<32x128xi32>
    %7 = arith.cmpi eq, %0, %6 : vector<32x128xi32>
    %8 = arith.ori %5, %7 : vector<32x128xi1>
    %9 = vector.broadcast %3 : vector<1x128xi32> to vector<32x128xi32>
    %10 = arith.cmpi eq, %0, %9 : vector<32x128xi32>
    %11 = arith.ori %8, %10 : vector<32x128xi1>
    %12 = arith.extui %11 : vector<32x128xi1> to vector<32x128xi32>
    %13 = arith.sitofp %12 : vector<32x128xi32> to vector<32x128xf32>
    %14 = arith.truncf %13 : vector<32x128xf32> to vector<32x128xbf16>
    %c0_3 = arith.constant 0 : index
    %c0_4 = arith.constant 0 : index
    %15 = vector.load %arg2[%c0_3, %c0_4] : memref<192x32xbf16, #tpu.memory_space<vmem>>, vector<192x32xbf16>
    %cst = arith.constant dense<0.000000e+00> : vector<192x128xf32>
    %16 = tpu.matmul %15, %14, %cst {dimension_numbers = #tpu.dot_dimension_numbers<[1], [0], [0], [1], [0, 0, 1, 1], [], []>} : vector<192x32xbf16>, vector<32x128xbf16>, vector<192x128xf32> -> vector<192x128xf32>
    %c0_5 = arith.constant 0 : index
    %c0_6 = arith.constant 0 : index
    %17 = vector.load %arg3[%c0_5, %c0_6] : memref<192x1xf32, #tpu.memory_space<vmem>>, vector<192x1xf32>
    %18 = vector.broadcast %17 : vector<192x1xf32> to vector<192x128xf32>
    %19 = arith.addf %16, %18 : vector<192x128xf32>
    %20 = vector.extract_strided_slice %19 {offsets = [0, 0], sizes = [64, 128], strides = [1, 1]} : vector<192x128xf32> to vector<64x128xf32>
    %cst_7 = arith.constant 5.000000e-01 : f32
    %21 = vector.broadcast %cst_7 : f32 to vector<64x128xf32>
    %22 = arith.mulf %21, %20 : vector<64x128xf32>
    %23 = math.tanh %22 : vector<64x128xf32>
    %cst_8 = arith.constant 5.000000e-01 : f32
    %24 = vector.broadcast %cst_8 : f32 to vector<64x128xf32>
    %25 = arith.mulf %24, %23 : vector<64x128xf32>
    %cst_9 = arith.constant 5.000000e-01 : f32
    %26 = vector.broadcast %cst_9 : f32 to vector<64x128xf32>
    %27 = arith.addf %25, %26 : vector<64x128xf32>
    %28 = vector.extract_strided_slice %19 {offsets = [64, 0], sizes = [64, 128], strides = [1, 1]} : vector<192x128xf32> to vector<64x128xf32>
    %29 = math.tanh %28 : vector<64x128xf32>
    %30 = vector.extract_strided_slice %19 {offsets = [128, 0], sizes = [64, 128], strides = [1, 1]} : vector<192x128xf32> to vector<64x128xf32>
    %cst_10 = arith.constant 5.000000e-01 : f32
    %31 = vector.broadcast %cst_10 : f32 to vector<64x128xf32>
    %32 = arith.mulf %31, %30 : vector<64x128xf32>
    %33 = math.tanh %32 : vector<64x128xf32>
    %cst_11 = arith.constant 5.000000e-01 : f32
    %34 = vector.broadcast %cst_11 : f32 to vector<64x128xf32>
    %35 = arith.mulf %34, %33 : vector<64x128xf32>
    %cst_12 = arith.constant 5.000000e-01 : f32
    %36 = vector.broadcast %cst_12 : f32 to vector<64x128xf32>
    %37 = arith.addf %35, %36 : vector<64x128xf32>
    %38 = arith.mulf %27, %29 : vector<64x128xf32>
    %39 = math.tanh %38 : vector<64x128xf32>
    %40 = arith.mulf %37, %39 : vector<64x128xf32>
    %c0_13 = arith.constant 0 : index
    %c0_14 = arith.constant 0 : index
    %41 = vector.load %arg4[%c0_13, %c0_14] : memref<64x64xbf16, #tpu.memory_space<vmem>>, vector<64x64xbf16>
    %42 = arith.truncf %40 : vector<64x128xf32> to vector<64x128xbf16>
    %cst_15 = arith.constant dense<0.000000e+00> : vector<64x128xf32>
    %43 = tpu.matmul %41, %42, %cst_15 {dimension_numbers = #tpu.dot_dimension_numbers<[1], [0], [0], [1], [0, 0, 1, 1], [], []>} : vector<64x64xbf16>, vector<64x128xbf16>, vector<64x128xf32> -> vector<64x128xf32>
    %c0_16 = arith.constant 0 : index
    %c0_17 = arith.constant 0 : index
    %44 = vector.load %arg5[%c0_16, %c0_17] : memref<64x1xf32, #tpu.memory_space<vmem>>, vector<64x1xf32>
    %45 = vector.broadcast %44 : vector<64x1xf32> to vector<64x128xf32>
    %46 = arith.addf %43, %45 : vector<64x128xf32>
    %cst_18 = arith.constant 0.000000e+00 : f32
    %47 = vector.broadcast %cst_18 : f32 to vector<64x128xf32>
    %48 = arith.maximumf %46, %47 : vector<64x128xf32>
    %c0_19 = arith.constant 0 : index
    %c0_20 = arith.constant 0 : index
    %49 = vector.load %arg6[%c0_19, %c0_20] : memref<64x1xf32, #tpu.memory_space<vmem>>, vector<64x1xf32>
    %50 = vector.broadcast %49 : vector<64x1xf32> to vector<64x128xf32>
    %51 = arith.mulf %48, %50 : vector<64x128xf32>
    %cst_21 = arith.constant dense<0.000000e+00> : vector<128xf32>
    %52 = vector.multi_reduction <add>, %51, %cst_21 [0] : vector<64x128xf32> to vector<128xf32>
    %53 = vector.shape_cast %52 : vector<128xf32> to vector<1x128xf32>
    %c0_22 = arith.constant 0 : index
    %c0_23 = arith.constant 0 : index
    %54 = vector.load %arg7[%c0_22, %c0_23] : memref<1x1xf32, #tpu.memory_space<vmem>>, vector<1x1xf32>
    %55 = vector.broadcast %54 : vector<1x1xf32> to vector<1x128xf32>
    %56 = arith.addf %53, %55 : vector<1x128xf32>
    %c0_24 = arith.constant 0 : index
    %c0_25 = arith.constant 0 : index
    %57 = vector.load %arg8[%c0_24, %c0_25] : memref<1x128xf32, #tpu.memory_space<vmem>>, vector<1x128xf32>
    tpu.vector_store %arg8[%c0_24, %c0_25], %56 {strides = array<i32>} : memref<1x128xf32, #tpu.memory_space<vmem>>, vector<1x128xf32>,
    return
  }
  func.func @transform_0(%arg0: i32) -> (i32, i32) {
    %c0_i32 = arith.constant 0 : i32
    %c0_i32_0 = arith.constant 0 : i32
    return %c0_i32, %arg0 : i32, i32
  }
  func.func @transform_1(%arg0: i32) -> (i32, i32) {
    %c0_i32 = arith.constant 0 : i32
    %c0_i32_0 = arith.constant 0 : i32
    %c0_i32_1 = arith.constant 0 : i32
    return %c0_i32, %c0_i32_0 : i32, i32
  }
  func.func @transform_2(%arg0: i32) -> (i32, i32) {
    %c0_i32 = arith.constant 0 : i32
    %c0_i32_0 = arith.constant 0 : i32
    %c0_i32_1 = arith.constant 0 : i32
    return %c0_i32, %c0_i32_0 : i32, i32
  }
  func.func @transform_3(%arg0: i32) -> (i32, i32) {
    %c0_i32 = arith.constant 0 : i32
    %c0_i32_0 = arith.constant 0 : i32
    %c0_i32_1 = arith.constant 0 : i32
    return %c0_i32, %c0_i32_0 : i32, i32
  }
  func.func @transform_4(%arg0: i32) -> (i32, i32) {
    %c0_i32 = arith.constant 0 : i32
    %c0_i32_0 = arith.constant 0 : i32
    %c0_i32_1 = arith.constant 0 : i32
    return %c0_i32, %c0_i32_0 : i32, i32
  }
  func.func @transform_5(%arg0: i32) -> (i32, i32) {
    %c0_i32 = arith.constant 0 : i32
    %c0_i32_0 = arith.constant 0 : i32
    %c0_i32_1 = arith.constant 0 : i32
    return %c0_i32, %c0_i32_0 : i32, i32
  }
  func.func @transform_6(%arg0: i32) -> (i32, i32) {
    %c0_i32 = arith.constant 0 : i32
    %c0_i32_0 = arith.constant 0 : i32
    %c0_i32_1 = arith.constant 0 : i32
    return %c0_i32, %c0_i32_0 : i32, i32
  }
  func.func @transform_7(%arg0: i32) -> (i32, i32) {
    %c0_i32 = arith.constant 0 : i32
    %c0_i32_0 = arith.constant 0 : i32
    return %c0_i32, %arg0 : i32, i32
  }
}

</mosaic_0001>

<llo_original>
// kernel: tpu_custom_call.1
$region0: #{tpu_custom_call.1}
  #allocation0 [shape = 'u32[]', space=smem, size = 0x4, offset = 0x4, fixed_abs, tag = 'smem constant byte address 0x4 - core index']
  #allocation1 [shape = 'u32[72,128]{1,0:T(1,128)}', space=vmem, size = 0x9000, scoped, tag = 'internal scratch']
  #allocation2 [shape = 'f32[1,1]{1,0:T(1,128)S(1)}', space=vmem, size = 0x200, scoped, tag = 'scoped memory for tpu_custom_call.1']
  %s0 = inlined_call_operand.vmem [shape: s32[3,128], index: 0, kind: input, shape index: {}]
  %s1 = inlined_call_operand.vmem [shape: bf16[192,32], index: 1, kind: input, shape index: {}]
  %s2 = inlined_call_operand.vmem [shape: f32[192,1], index: 2, kind: input, shape index: {}]
  %s3 = inlined_call_operand.vmem [shape: bf16[64,64], index: 3, kind: input, shape index: {}]
  %s4 = inlined_call_operand.vmem [shape: f32[64,1], index: 4, kind: input, shape index: {}]
  %s5 = inlined_call_operand.vmem [shape: f32[64,1], index: 5, kind: input, shape index: {}]
  %s6 = inlined_call_operand.<no memory space> [shape: f32[1,1], index: 6, kind: input, shape index: {}]
  %s7 = inlined_call_operand.hbm [shape: f32[1,128], index: 7, kind: output, shape index: {}]
  %s8 = sld [smem:[#allocation0]]
  $region38: #{tpu_custom_call.1} parent=0
    _
  %s10 = ssub.s32 1, %s8
  %s11 = scalar_select 0, %s10, %s8
  %v12 = vstv %s6
  %13 = vst [vmem:[#allocation2] sm:$0x1] %v12
  $region1: #{tpu_custom_call.1} parent=0
    #allocation3 [shape = 'u8[512]{0}', space=vmem, size = 0x400, scoped, tag = 'output window, operand 0, single buffered']
    #allocation4 [shape = 's32[1]{0}', space=sflag, size = 0x4, scoped, tag = 'scoped memory for tpu_custom_call.1']
    %14 = vsyncpa [#allocation4], 0
    // Predicated region
    $region2: #{tpu_custom_call.1} parent=1 // pred_check
      _
    $region3: #{tpu_custom_call.1} parent=1 // pred_check_branch
      %16 = sbr.rel (0) target = $region5
    $region4: #{tpu_custom_call.1} parent=1 // pred_region
      _
    $region5: #{tpu_custom_call.1} parent=1 // pred_fallthru
      _
    // Predicated region
    $region6: #{tpu_custom_call.1} parent=1 // pred_check
      _
    $region7: #{tpu_custom_call.1} parent=1 // pred_check_branch
      %18 = sbr.rel (0) target = $region9
    $region8: #{tpu_custom_call.1} parent=1 // pred_region
      _
    $region9: #{tpu_custom_call.1} parent=1 // pred_fallthru
      _
    // Predicated region
    $region10: #{tpu_custom_call.1} parent=1 // pred_check
      _
    $region11: #{tpu_custom_call.1} parent=1 // pred_check_branch
      %20 = sbr.rel (0) target = $region13
    $region12: #{tpu_custom_call.1} parent=1 // pred_region
      _
    $region13: #{tpu_custom_call.1} parent=1 // pred_fallthru
      _
    // Predicated region
    $region14: #{tpu_custom_call.1} parent=1 // pred_check
      _
    $region15: #{tpu_custom_call.1} parent=1 // pred_check_branch
      %22 = sbr.rel (0) target = $region17
    $region16: #{tpu_custom_call.1} parent=1 // pred_region
      _
    $region17: #{tpu_custom_call.1} parent=1 // pred_fallthru
      _
    // Predicated region
    $region18: #{tpu_custom_call.1} parent=1 // pred_check
      _
    $region19: #{tpu_custom_call.1} parent=1 // pred_check_branch
      %24 = sbr.rel (0) target = $region21
    $region20: #{tpu_custom_call.1} parent=1 // pred_region
      _
    $region21: #{tpu_custom_call.1} parent=1 // pred_fallthru
      _
    // Predicated region
    $region22: #{tpu_custom_call.1} parent=1 // pred_check
      _
    $region23: #{tpu_custom_call.1} parent=1 // pred_check_branch
      %26 = sbr.rel (0) target = $region25
    $region24: #{tpu_custom_call.1} parent=1 // pred_region
      _
    $region25: #{tpu_custom_call.1} parent=1 // pred_fallthru
      _
    // Predicated region
    $region26: #{tpu_custom_call.1} parent=1 // pred_check
      _
    $region27: #{tpu_custom_call.1} parent=1 // pred_check_branch
      %28 = sbr.rel (0) target = $region29
    $region28: #{tpu_custom_call.1} parent=1 // pred_region
      _
    $region29: #{tpu_custom_call.1} parent=1 // pred_fallthru
      _
    %v30 = vlaneseq
    %v31 = vshrl.u32 %v30, 7
    %v32 = vadd.s32 %v31, 8
    %v33 = vadd.s32 %v31, 16
    %v34 = vadd.s32 %v31, 24
    %v35 = vld [vmem:[%s0] sm:$0x1]
    %v36 = vld [vmem:[%s0 + $0x1] sm:$0x1]
    %v37 = vld [vmem:[%s0 + $0x2] sm:$0x1]
    %v38 = vperm.slane %v35, 0
    %vm39 = vcmp.eq.s32.totalorder %v31, %v38
    %vm40 = vcmp.eq.s32.totalorder %v32, %v38
    %vm41 = vcmp.eq.s32.totalorder %v33, %v38
    %vm42 = vcmp.eq.s32.totalorder %v34, %v38
    %v43 = vperm.slane %v36, 0
    %vm44 = vcmp.eq.s32.totalorder %v31, %v43
    %vm45 = vcmp.eq.s32.totalorder %v32, %v43
    %vm46 = vcmp.eq.s32.totalorder %v33, %v43
    %vm47 = vcmp.eq.s32.totalorder %v34, %v43
    %vm48 = vmor %vm39, %vm44
    %vm49 = vmor %vm40, %vm45
    %vm50 = vmor %vm41, %vm46
    %vm51 = vmor %vm42, %vm47
    %v52 = vperm.slane %v37, 0
    %vm53 = vcmp.eq.s32.totalorder %v31, %v52
    %vm54 = vcmp.eq.s32.totalorder %v32, %v52
    %vm55 = vcmp.eq.s32.totalorder %v33, %v52
    %vm56 = vcmp.eq.s32.totalorder %v34, %v52
    %vm57 = vmor %vm48, %vm53
    %vm58 = vmor %vm49, %vm54
    %vm59 = vmor %vm50, %vm55
    %vm60 = vmor %vm51, %vm56
    %v61 = vsel %vm57, 1, 0
    %v62 = vsel %vm58, 1, 0
    %v63 = vsel %vm59, 1, 0
    %v64 = vsel %vm60, 1, 0
    %v65 = vcvt.s32.f32 %v61
    %v66 = vcvt.s32.f32 %v62
    %v67 = vcvt.s32.f32 %v63
    %v68 = vcvt.s32.f32 %v64
    %v69 = vpack.c.bf16 %v66, %v65
    %v70 = vpack.c.bf16 %v68, %v67
    %v71 = vld [vmem:[%s1] sm:$0xf]
    %v72 = vld [vmem:[%s1 + $0x4] sm:$0xf]
    %v73 = vld [vmem:[%s1 + $0x8] sm:$0xf]
    %v74 = vld [vmem:[%s1 + $0xc] sm:$0xf]
    %v75 = vld [vmem:[%s1 + $0x10] sm:$0xf]
    %v76 = vld [vmem:[%s1 + $0x14] sm:$0xf]
    %v77 = vld [vmem:[%s1 + $0x18] sm:$0xf]
    %v78 = vld [vmem:[%s1 + $0x1c] sm:$0xf]
    %v79 = vld [vmem:[%s1 + $0x20] sm:$0xf]
    %v80 = vld [vmem:[%s1 + $0x24] sm:$0xf]
    %v81 = vld [vmem:[%s1 + $0x28] sm:$0xf]
    %v82 = vld [vmem:[%s1 + $0x2c] sm:$0xf]
    %v83 = vld [vmem:[%s1 + $0x30] sm:$0xf]
    %v84 = vld [vmem:[%s1 + $0x34] sm:$0xf]
    %v85 = vld [vmem:[%s1 + $0x38] sm:$0xf]
    %v86 = vld [vmem:[%s1 + $0x3c] sm:$0xf]
    %v87 = vld [vmem:[%s1 + $0x40] sm:$0xf]
    %v88 = vld [vmem:[%s1 + $0x44] sm:$0xf]
    %v89 = vld [vmem:[%s1 + $0x48] sm:$0xf]
    %v90 = vld [vmem:[%s1 + $0x4c] sm:$0xf]
    %v91 = vld [vmem:[%s1 + $0x50] sm:$0xf]
    %v92 = vld [vmem:[%s1 + $0x54] sm:$0xf]
    %v93 = vld [vmem:[%s1 + $0x58] sm:$0xf]
    %v94 = vld [vmem:[%s1 + $0x5c] sm:$0xf]
    %v95 = vld [vmem:[%s2] sm:$0xff]
    %v96 = vld [vmem:[%s2 + $0x8] sm:$0xff]
    %v97 = vld [vmem:[%s2 + $0x10] sm:$0xff]
    %v98 = vld [vmem:[%s2 + $0x18] sm:$0xff]
    %v99 = vld [vmem:[%s2 + $0x20] sm:$0xff]
    %v100 = vld [vmem:[%s2 + $0x28] sm:$0xff]
    %v101 = vld [vmem:[%s2 + $0x30] sm:$0xff]
    %v102 = vld [vmem:[%s2 + $0x38] sm:$0xff]
    %v103 = vld [vmem:[%s2 + $0x40] sm:$0xff]
    %v104 = vld [vmem:[%s2 + $0x48] sm:$0xff]
    %v105 = vld [vmem:[%s2 + $0x50] sm:$0xff]
    %v106 = vld [vmem:[%s2 + $0x58] sm:$0xff]
    %v107 = vld [vmem:[%s2 + $0x60] sm:$0xff]
    %v108 = vld [vmem:[%s2 + $0x68] sm:$0xff]
    %v109 = vld [vmem:[%s2 + $0x70] sm:$0xff]
    %v110 = vld [vmem:[%s2 + $0x78] sm:$0xff]
    %v111 = vld [vmem:[%s2 + $0x80] sm:$0xff]
    %v112 = vld [vmem:[%s2 + $0x88] sm:$0xff]
    %v113 = vld [vmem:[%s2 + $0x90] sm:$0xff]
    %v114 = vld [vmem:[%s2 + $0x98] sm:$0xff]
    %v115 = vld [vmem:[%s2 + $0xa0] sm:$0xff]
    %v116 = vld [vmem:[%s2 + $0xa8] sm:$0xff]
    %v117 = vld [vmem:[%s2 + $0xb0] sm:$0xff]
    %v118 = vld [vmem:[%s2 + $0xb8] sm:$0xff]
    %120 = vset.pattern.permute.xlu0 0
    %121 = vperm.xlu0 %120, %v95
    %v122 = vpop.permute.xlu0 %121
    %125 = vset.pattern.permute.xlu0 0
    %126 = vperm.xlu0 %125, %v96
    %v127 = vpop.permute.xlu0 %126
    %130 = vset.pattern.permute.xlu0 0
    %131 = vperm.xlu0 %130, %v97
    %v132 = vpop.permute.xlu0 %131
    %135 = vset.pattern.permute.xlu0 0
    %136 = vperm.xlu0 %135, %v98
    %v137 = vpop.permute.xlu0 %136
    %140 = vset.pattern.permute.xlu0 0
    %141 = vperm.xlu0 %140, %v99
    %v142 = vpop.permute.xlu0 %141
    %145 = vset.pattern.permute.xlu0 0
    %146 = vperm.xlu0 %145, %v100
    %v147 = vpop.permute.xlu0 %146
    %150 = vset.pattern.permute.xlu0 0
    %151 = vperm.xlu0 %150, %v101
    %v152 = vpop.permute.xlu0 %151
    %155 = vset.pattern.permute.xlu0 0
    %156 = vperm.xlu0 %155, %v102
    %v157 = vpop.permute.xlu0 %156
    %160 = vset.pattern.permute.xlu0 0
    %161 = vperm.xlu0 %160, %v103
    %v162 = vpop.permute.xlu0 %161
    %165 = vset.pattern.permute.xlu0 0
    %166 = vperm.xlu0 %165, %v104
    %v167 = vpop.permute.xlu0 %166
    %170 = vset.pattern.permute.xlu0 0
    %171 = vperm.xlu0 %170, %v105
    %v172 = vpop.permute.xlu0 %171
    %175 = vset.pattern.permute.xlu0 0
    %176 = vperm.xlu0 %175, %v106
    %v177 = vpop.permute.xlu0 %176
    %180 = vset.pattern.permute.xlu0 0
    %181 = vperm.xlu0 %180, %v107
    %v182 = vpop.permute.xlu0 %181
    %185 = vset.pattern.permute.xlu0 0
    %186 = vperm.xlu0 %185, %v108
    %v187 = vpop.permute.xlu0 %186
    %190 = vset.pattern.permute.xlu0 0
    %191 = vperm.xlu0 %190, %v109
    %v192 = vpop.permute.xlu0 %191
    %195 = vset.pattern.permute.xlu0 0
    %196 = vperm.xlu0 %195, %v110
    %v197 = vpop.permute.xlu0 %196
    %200 = vset.pattern.permute.xlu0 0
    %201 = vperm.xlu0 %200, %v111
    %v202 = vpop.permute.xlu0 %201
    %205 = vset.pattern.permute.xlu0 0
    %206 = vperm.xlu0 %205, %v112
    %v207 = vpop.permute.xlu0 %206
    %210 = vset.pattern.permute.xlu0 0
    %211 = vperm.xlu0 %210, %v113
    %v212 = vpop.permute.xlu0 %211
    %215 = vset.pattern.permute.xlu0 0
    %216 = vperm.xlu0 %215, %v114
    %v217 = vpop.permute.xlu0 %216
    %220 = vset.pattern.permute.xlu0 0
    %221 = vperm.xlu0 %220, %v115
    %v222 = vpop.permute.xlu0 %221
    %225 = vset.pattern.permute.xlu0 0
    %226 = vperm.xlu0 %225, %v116
    %v227 = vpop.permute.xlu0 %226
    %230 = vset.pattern.permute.xlu0 0
    %231 = vperm.xlu0 %230, %v117
    %v232 = vpop.permute.xlu0 %231
    %235 = vset.pattern.permute.xlu0 0
    %236 = vperm.xlu0 %235, %v118
    %v237 = vpop.permute.xlu0 %236
    %v263 = vunpack.c.l.b16 %v71
    %v264 = vunpack.c.l.b16 %v72
    %v265 = vunpack.c.l.b16 %v73
    %v266 = vunpack.c.l.b16 %v74
    %v267 = vunpack.c.l.b16 %v75
    %v268 = vunpack.c.l.b16 %v76
    %v269 = vunpack.c.l.b16 %v77
    %v270 = vunpack.c.l.b16 %v78
    %v271 = vunpack.c.l.b16 %v79
    %v272 = vunpack.c.l.b16 %v80
    %v273 = vunpack.c.l.b16 %v81
    %v274 = vunpack.c.l.b16 %v82
    %v275 = vunpack.c.l.b16 %v83
    %v276 = vunpack.c.l.b16 %v84
    %v277 = vunpack.c.l.b16 %v85
    %v278 = vunpack.c.l.b16 %v86
    %v279 = vunpack.c.l.b16 %v87
    %v280 = vunpack.c.l.b16 %v88
    %v281 = vunpack.c.l.b16 %v89
    %v282 = vunpack.c.l.b16 %v90
    %v283 = vunpack.c.l.b16 %v91
    %v284 = vunpack.c.l.b16 %v92
    %v285 = vunpack.c.l.b16 %v93
    %v286 = vunpack.c.l.b16 %v94
    %v287 = vpack.c.b16 %v264, %v263
    %v288 = vpack.c.b16 %v266, %v265
    %v289 = vpack.c.b16 %v268, %v267
    %v290 = vpack.c.b16 %v270, %v269
    %v291 = vpack.c.b16 %v272, %v271
    %v292 = vpack.c.b16 %v274, %v273
    %v293 = vpack.c.b16 %v276, %v275
    %v294 = vpack.c.b16 %v278, %v277
    %v295 = vpack.c.b16 %v280, %v279
    %v296 = vpack.c.b16 %v282, %v281
    %v297 = vpack.c.b16 %v284, %v283
    %v298 = vpack.c.b16 %v286, %v285
    %vm299 = vcmask 261120
    %v301 = vsel %vm299, %v287, 0
    %v304 = vsel %vm299, %v288, 0
    %v307 = vsel %vm299, %v289, 0
    %v310 = vsel %vm299, %v290, 0
    %v313 = vsel %vm299, %v291, 0
    %v316 = vsel %vm299, %v292, 0
    %v319 = vsel %vm299, %v293, 0
    %v322 = vsel %vm299, %v294, 0
    %v325 = vsel %vm299, %v295, 0
    %v328 = vsel %vm299, %v296, 0
    %v331 = vsel %vm299, %v297, 0
    %v334 = vsel %vm299, %v298, 0
    %336 = vmatpush.bf16.msra.mxu0 0
    %337 = vmatpush.bf16.msra.mxu0 0
    %338 = vmatpush.bf16.msra.mxu0 0
    %339 = vmatpush.bf16.msra.mxu0 0
    %340 = vmatpush.bf16.msra.mxu0 0
    %341 = vmatpush.bf16.msra.mxu0 0
    %342 = vmatpush.bf16.msra.mxu0 %v70
    %343 = vmatpush.bf16.msra.mxu0 %v69
    %344 = vmatmul.bf16.gmra.mxu0 %v301
    %v345 = vpop.f32.mrf.mxu0
    %v346 = vadd.f32 %v122, %v345
    %v347 = vpop.f32.mrf.mxu0
    %v348 = vadd.f32 %v127, %v347
    %349 = vmatmul.bf16.gmra.mxu0 %v304
    %v350 = vpop.f32.mrf.mxu0
    %v351 = vadd.f32 %v132, %v350
    %v352 = vpop.f32.mrf.mxu0
    %v353 = vadd.f32 %v137, %v352
    %354 = vmatmul.bf16.gmra.mxu0 %v307
    %v355 = vpop.f32.mrf.mxu0
    %v356 = vadd.f32 %v142, %v355
    %v357 = vpop.f32.mrf.mxu0
    %v358 = vadd.f32 %v147, %v357
    %359 = vmatmul.bf16.gmra.mxu0 %v310
    %v360 = vpop.f32.mrf.mxu0
    %v361 = vadd.f32 %v152, %v360
    %v362 = vpop.f32.mrf.mxu0
    %v363 = vadd.f32 %v157, %v362
    %364 = vmatmul.bf16.gmra.mxu0 %v313
    %v365 = vpop.f32.mrf.mxu0
    %v366 = vadd.f32 %v162, %v365
    %v367 = vpop.f32.mrf.mxu0
    %v368 = vadd.f32 %v167, %v367
    %369 = vmatmul.bf16.gmra.mxu0 %v316
    %v370 = vpop.f32.mrf.mxu0
    %v371 = vadd.f32 %v172, %v370
    %v372 = vpop.f32.mrf.mxu0
    %v373 = vadd.f32 %v177, %v372
    %374 = vmatmul.bf16.gmra.mxu0 %v319
    %v375 = vpop.f32.mrf.mxu0
    %v376 = vadd.f32 %v182, %v375
    %v377 = vpop.f32.mrf.mxu0
    %v378 = vadd.f32 %v187, %v377
    %379 = vmatmul.bf16.gmra.mxu0 %v322
    %v380 = vpop.f32.mrf.mxu0
    %v381 = vadd.f32 %v192, %v380
    %v382 = vpop.f32.mrf.mxu0
    %v383 = vadd.f32 %v197, %v382
    %384 = vmatmul.bf16.gmra.mxu0 %v325
    %v385 = vpop.f32.mrf.mxu0
    %v386 = vadd.f32 %v202, %v385
    %v387 = vpop.f32.mrf.mxu0
    %v388 = vadd.f32 %v207, %v387
    %389 = vmatmul.bf16.gmra.mxu0 %v328
    %v390 = vpop.f32.mrf.mxu0
    %v391 = vadd.f32 %v212, %v390
    %v392 = vpop.f32.mrf.mxu0
    %v393 = vadd.f32 %v217, %v392
    %394 = vmatmul.bf16.gmra.mxu0 %v331
    %v395 = vpop.f32.mrf.mxu0
    %v396 = vadd.f32 %v222, %v395
    %v397 = vpop.f32.mrf.mxu0
    %v398 = vadd.f32 %v227, %v397
    %399 = vmatmul.bf16.gmra.mxu0 %v334
    %v400 = vpop.f32.mrf.mxu0
    %v401 = vadd.f32 %v232, %v400
    %v402 = vpop.f32.mrf.mxu0
    %v403 = vadd.f32 %v237, %v402
    %404 = vdwg.mxu0
    %v405 = vmul.f32 %v346, 0.5
    %v406 = vmul.f32 %v348, 0.5
    %v407 = vmul.f32 %v351, 0.5
    %v408 = vmul.f32 %v353, 0.5
    %v409 = vmul.f32 %v356, 0.5
    %v410 = vmul.f32 %v358, 0.5
    %v411 = vmul.f32 %v361, 0.5
    %v412 = vmul.f32 %v363, 0.5
    %v413 = vtanh.pop %v405
    %v414 = vtanh.pop %v406
    %v415 = vtanh.pop %v407
    %v416 = vtanh.pop %v408
    %v417 = vtanh.pop %v409
    %v418 = vtanh.pop %v410
    %v419 = vtanh.pop %v411
    %v420 = vtanh.pop %v412
    %v421 = vmul.f32 %v413, 0.5
    %v422 = vmul.f32 %v414, 0.5
    %v423 = vmul.f32 %v415, 0.5
    %v424 = vmul.f32 %v416, 0.5
    %v425 = vmul.f32 %v417, 0.5
    %v426 = vmul.f32 %v418, 0.5
    %v427 = vmul.f32 %v419, 0.5
    %v428 = vmul.f32 %v420, 0.5
    %v429 = vadd.f32 %v421, 0.5
    %v430 = vadd.f32 %v422, 0.5
    %v431 = vadd.f32 %v423, 0.5
    %v432 = vadd.f32 %v424, 0.5
    %v433 = vadd.f32 %v425, 0.5
    %v434 = vadd.f32 %v426, 0.5
    %v435 = vadd.f32 %v427, 0.5
    %v436 = vadd.f32 %v428, 0.5
    %v437 = vtanh.pop %v366
    %v438 = vtanh.pop %v368
    %v439 = vtanh.pop %v371
    %v440 = vtanh.pop %v373
    %v441 = vtanh.pop %v376
    %v442 = vtanh.pop %v378
    %v443 = vtanh.pop %v381
    %v444 = vtanh.pop %v383
    %v445 = vmul.f32 %v386, 0.5
    %v446 = vmul.f32 %v388, 0.5
    %v447 = vmul.f32 %v391, 0.5
    %v448 = vmul.f32 %v393, 0.5
    %v449 = vmul.f32 %v396, 0.5
    %v450 = vmul.f32 %v398, 0.5
    %v451 = vmul.f32 %v401, 0.5
    %v452 = vmul.f32 %v403, 0.5
    %v453 = vtanh.pop %v445
    %v454 = vtanh.pop %v446
    %v455 = vtanh.pop %v447
    %v456 = vtanh.pop %v448
    %v457 = vtanh.pop %v449
    %v458 = vtanh.pop %v450
    %v459 = vtanh.pop %v451
    %v460 = vtanh.pop %v452
    %v461 = vmul.f32 %v453, 0.5
    %v462 = vmul.f32 %v454, 0.5
    %v463 = vmul.f32 %v455, 0.5
    %v464 = vmul.f32 %v456, 0.5
    %v465 = vmul.f32 %v457, 0.5
    %v466 = vmul.f32 %v458, 0.5
    %v467 = vmul.f32 %v459, 0.5
    %v468 = vmul.f32 %v460, 0.5
    %v469 = vadd.f32 %v461, 0.5
    %v470 = vadd.f32 %v462, 0.5
    %v471 = vadd.f32 %v463, 0.5
    %v472 = vadd.f32 %v464, 0.5
    %v473 = vadd.f32 %v465, 0.5
    %v474 = vadd.f32 %v466, 0.5
    %v475 = vadd.f32 %v467, 0.5
    %v476 = vadd.f32 %v468, 0.5
    %v477 = vmul.f32 %v429, %v437
    %v478 = vmul.f32 %v430, %v438
    %v479 = vmul.f32 %v431, %v439
    %v480 = vmul.f32 %v432, %v440
    %v481 = vmul.f32 %v433, %v441
    %v482 = vmul.f32 %v434, %v442
    %v483 = vmul.f32 %v435, %v443
    %v484 = vmul.f32 %v436, %v444
    %v485 = vtanh.pop %v477
    %v486 = vtanh.pop %v478
    %v487 = vtanh.pop %v479
    %v488 = vtanh.pop %v480
    %v489 = vtanh.pop %v481
    %v490 = vtanh.pop %v482
    %v491 = vtanh.pop %v483
    %v492 = vtanh.pop %v484
    %v493 = vmul.f32 %v469, %v485
    %v494 = vmul.f32 %v470, %v486
    %v495 = vmul.f32 %v471, %v487
    %v496 = vmul.f32 %v472, %v488
    %v497 = vmul.f32 %v473, %v489
    %v498 = vmul.f32 %v474, %v490
    %v499 = vmul.f32 %v475, %v491
    %v500 = vmul.f32 %v476, %v492
    %v501 = vld [vmem:[%s3] sm:$0xf]
    %v502 = vld [vmem:[%s3 + $0x4] sm:$0xf]
    %v503 = vld [vmem:[%s3 + $0x8] sm:$0xf]
    %v504 = vld [vmem:[%s3 + $0xc] sm:$0xf]
    %v505 = vld [vmem:[%s3 + $0x10] sm:$0xf]
    %v506 = vld [vmem:[%s3 + $0x14] sm:$0xf]
    %v507 = vld [vmem:[%s3 + $0x18] sm:$0xf]
    %v508 = vld [vmem:[%s3 + $0x1c] sm:$0xf]
    %v509 = vpack.c.bf16 %v494, %v493
    %v510 = vpack.c.bf16 %v496, %v495
    %v511 = vpack.c.bf16 %v498, %v497
    %v512 = vpack.c.bf16 %v500, %v499
    %v513 = vld [vmem:[%s4] sm:$0xff]
    %v514 = vld [vmem:[%s4 + $0x8] sm:$0xff]
    %v515 = vld [vmem:[%s4 + $0x10] sm:$0xff]
    %v516 = vld [vmem:[%s4 + $0x18] sm:$0xff]
    %v517 = vld [vmem:[%s4 + $0x20] sm:$0xff]
    %v518 = vld [vmem:[%s4 + $0x28] sm:$0xff]
    %v519 = vld [vmem:[%s4 + $0x30] sm:$0xff]
    %v520 = vld [vmem:[%s4 + $0x38] sm:$0xff]
    %522 = vset.pattern.permute.xlu0 0
    %523 = vperm.xlu0 %522, %v513
    %v524 = vpop.permute.xlu0 %523
    %527 = vset.pattern.permute.xlu0 0
    %528 = vperm.xlu0 %527, %v514
    %v529 = vpop.permute.xlu0 %528
    %532 = vset.pattern.permute.xlu0 0
    %533 = vperm.xlu0 %532, %v515
    %v534 = vpop.permute.xlu0 %533
    %537 = vset.pattern.permute.xlu0 0
    %538 = vperm.xlu0 %537, %v516
    %v539 = vpop.permute.xlu0 %538
    %542 = vset.pattern.permute.xlu0 0
    %543 = vperm.xlu0 %542, %v517
    %v544 = vpop.permute.xlu0 %543
    %547 = vset.pattern.permute.xlu0 0
    %548 = vperm.xlu0 %547, %v518
    %v549 = vpop.permute.xlu0 %548
    %552 = vset.pattern.permute.xlu0 0
    %553 = vperm.xlu0 %552, %v519
    %v554 = vpop.permute.xlu0 %553
    %557 = vset.pattern.permute.xlu0 0
    %558 = vperm.xlu0 %557, %v520
    %v559 = vpop.permute.xlu0 %558
    %v569 = vunpack.c.l.b16 %v501
    %v570 = vunpack.c.l.b16 %v502
    %v571 = vunpack.c.l.b16 %v503
    %v572 = vunpack.c.l.b16 %v504
    %v573 = vunpack.c.l.b16 %v505
    %v574 = vunpack.c.l.b16 %v506
    %v575 = vunpack.c.l.b16 %v507
    %v576 = vunpack.c.l.b16 %v508
    %v577 = vpack.c.b16 %v570, %v569
    %v578 = vpack.c.b16 %v572, %v571
    %v579 = vpack.c.b16 %v574, %v573
    %v580 = vpack.c.b16 %v576, %v575
    %vm581 = vcmask 523264
    %v583 = vsel %vm581, %v577, 0
    %v586 = vsel %vm581, %v578, 0
    %v589 = vsel %vm581, %v579, 0
    %v592 = vsel %vm581, %v580, 0
    %594 = vmatpush.bf16.msra.mxu0 0
    %595 = vmatpush.bf16.msra.mxu0 0
    %596 = vmatpush.bf16.msra.mxu0 0
    %597 = vmatpush.bf16.msra.mxu0 0
    %598 = vmatpush.bf16.msra.mxu0 %v512
    %599 = vmatpush.bf16.msra.mxu0 %v511
    %600 = vmatpush.bf16.msra.mxu0 %v510
    %601 = vmatpush.bf16.msra.mxu0 %v509
    %602 = vmatmul.bf16.gmra.mxu0 %v583
    %v603 = vpop.f32.mrf.mxu0
    %v604 = vadd.f32 %v524, %v603
    %v605 = vpop.f32.mrf.mxu0
    %v606 = vadd.f32 %v529, %v605
    %607 = vmatmul.bf16.gmra.mxu0 %v586
    %v608 = vpop.f32.mrf.mxu0
    %v609 = vadd.f32 %v534, %v608
    %v610 = vpop.f32.mrf.mxu0
    %v611 = vadd.f32 %v539, %v610
    %612 = vmatmul.bf16.gmra.mxu0 %v589
    %v613 = vpop.f32.mrf.mxu0
    %v614 = vadd.f32 %v544, %v613
    %v615 = vpop.f32.mrf.mxu0
    %v616 = vadd.f32 %v549, %v615
    %617 = vmatmul.bf16.gmra.mxu0 %v592
    %v618 = vpop.f32.mrf.mxu0
    %v619 = vadd.f32 %v554, %v618
    %v620 = vpop.f32.mrf.mxu0
    %v621 = vadd.f32 %v559, %v620
    %622 = vdwg.mxu0
    %v623 = vmax.f32 %v604, 0.0
    %v624 = vmax.f32 %v606, 0.0
    %v625 = vmax.f32 %v609, 0.0
    %v626 = vmax.f32 %v611, 0.0
    %v627 = vmax.f32 %v614, 0.0
    %v628 = vmax.f32 %v616, 0.0
    %v629 = vmax.f32 %v619, 0.0
    %v630 = vmax.f32 %v621, 0.0
    %v631 = vld [vmem:[%s5] sm:$0xff]
    %v632 = vld [vmem:[%s5 + $0x8] sm:$0xff]
    %v633 = vld [vmem:[%s5 + $0x10] sm:$0xff]
    %v634 = vld [vmem:[%s5 + $0x18] sm:$0xff]
    %v635 = vld [vmem:[%s5 + $0x20] sm:$0xff]
    %v636 = vld [vmem:[%s5 + $0x28] sm:$0xff]
    %v637 = vld [vmem:[%s5 + $0x30] sm:$0xff]
    %v638 = vld [vmem:[%s5 + $0x38] sm:$0xff]
    %640 = vset.pattern.permute.xlu0 0
    %641 = vperm.xlu0 %640, %v631
    %v642 = vpop.permute.xlu0 %641
    %645 = vset.pattern.permute.xlu0 0
    %646 = vperm.xlu0 %645, %v632
    %v647 = vpop.permute.xlu0 %646
    %650 = vset.pattern.permute.xlu0 0
    %651 = vperm.xlu0 %650, %v633
    %v652 = vpop.permute.xlu0 %651
    %655 = vset.pattern.permute.xlu0 0
    %656 = vperm.xlu0 %655, %v634
    %v657 = vpop.permute.xlu0 %656
    %660 = vset.pattern.permute.xlu0 0
    %661 = vperm.xlu0 %660, %v635
    %v662 = vpop.permute.xlu0 %661
    %665 = vset.pattern.permute.xlu0 0
    %666 = vperm.xlu0 %665, %v636
    %v667 = vpop.permute.xlu0 %666
    %670 = vset.pattern.permute.xlu0 0
    %671 = vperm.xlu0 %670, %v637
    %v672 = vpop.permute.xlu0 %671
    %675 = vset.pattern.permute.xlu0 0
    %676 = vperm.xlu0 %675, %v638
    %v677 = vpop.permute.xlu0 %676
    %v679 = vmul.f32 %v623, %v642
    %v680 = vmul.f32 %v624, %v647
    %v681 = vmul.f32 %v625, %v652
    %v682 = vmul.f32 %v626, %v657
    %v683 = vmul.f32 %v627, %v662
    %v684 = vmul.f32 %v628, %v667
    %v685 = vmul.f32 %v629, %v672
    %v686 = vmul.f32 %v630, %v677
    %v687 = vadd.f32 %v679, %v680
    %v688 = vadd.f32 %v687, %v681
    %v689 = vadd.f32 %v688, %v682
    %v690 = vadd.f32 %v689, %v683
    %v691 = vadd.f32 %v690, %v684
    %v692 = vadd.f32 %v691, %v685
    %v693 = vadd.f32 %v692, %v686
    %v694 = vrot.slane %v693, 4
    %v695 = vadd.f32 %v693, %v694
    %v696 = vrot.slane %v695, 2
    %v697 = vadd.f32 %v695, %v696
    %v698 = vrot.slane %v697, 1
    %v699 = vadd.f32 %v697, %v698
    %v700 = vld [vmem:[#allocation2] sm:$0x1]
    %702 = vset.pattern.permute.xlu0 0
    %703 = vperm.xlu0 %702, %v700
    %v704 = vpop.permute.xlu0 %703
    %v706 = vperm.slane %v704, 0
    %v707 = vadd.f32 %v699, %v706
    %708 = vst [vmem:[#allocation3] sm:$0x1] %v707
    // Predicated region
    $region30: #{tpu_custom_call.1} parent=1 // pred_check
      _
    $region31: #{tpu_custom_call.1} parent=1 // pred_check_branch
      %710 = sbr.rel (0) target = $region33
    $region32: #{tpu_custom_call.1} parent=1 // pred_region
      %712 = vsyncadd [#allocation4], 0
      %s714 = sshll.u32 [#allocation3], 4
      %s715 = int_to_ptr.vmem [resolvable:$true] %s714
      %s716 = sshll.u32 %s7, 4
      %s717 = int_to_ptr.hbm [resolvable:$true] %s716
      %719 = dma.vmem_to_hbm [thread:$0]  %s715, 16, %s717, [#allocation4]
    $region33: #{tpu_custom_call.1} parent=1 // pred_fallthru
      _
    // Predicated region
    $region34: #{tpu_custom_call.1} parent=1 // pred_check
      _
    $region35: #{tpu_custom_call.1} parent=1 // pred_check_branch
      %721 = sbr.rel (0) target = $region37
    $region36: #{tpu_custom_call.1} parent=1 // pred_region
      %723 = dma.done [#allocation4], 16
    $region37: #{tpu_custom_call.1} parent=1 // pred_fallthru
      _
    %724 = vsyncpa [#allocation4], 1

</llo_original>
